<compile_context>
chip_gen: v7x
topology: tpu7x:2x2x1
jax: 0.10.0
libtpu: 0.0.40
codegen_flags: <defaults>
</compile_context>

<pallas_src>
import jax
import jax.numpy as jnp
from jax.experimental import pallas as pl
from jax.experimental.pallas import tpu as pltpu


_INV_SQRT2 = 0.7071067811865476


def _gelu_exact(x):
    # Exact GELU (matches torch.nn.GELU default): 0.5*x*(1+erf(x/sqrt(2)))
    return 0.5 * x * (1.0 + jax.lax.erf(x * _INV_SQRT2))


def _vmem_capacity_bytes():
    """Physical VMEM per TensorCore; conservative fallback if the query fails."""
    try:
        return int(pltpu.get_tpu_info().vmem_capacity_bytes)
    except Exception:
        return 64 * 1024 * 1024  # v7x-sized fallback: safe on every generation


def _choose_tiles(C, HW, elt, tile_bytes):
    """Pick (c_tile, hw_tile) for the two-pass kernels.

    Prefers HW tiles of >= 512 lanes (long contiguous DMA rows). If C is so large
    that HW tiles would collapse below 512 lanes, tile over channels instead and
    keep full-length rows (pool is per-channel independent, apply is elementwise).
    """
    if C * HW * elt <= tile_bytes:
        return C, HW
    hw_cand = ((tile_bytes // max(C * elt, 1)) // 128) * 128
    if hw_cand >= 512 or C <= 8:
        return C, min(HW, max(hw_cand, 128))
    c_cand = ((tile_bytes // (HW * elt)) // 8) * 8
    if c_cand >= 8:
        return min(C, c_cand), HW
    # Pathological: huge HW and huge C -> tile both dims.
    c_tile = min(C, 8)
    hw_cand2 = ((tile_bytes // max(c_tile * elt, 1)) // 128) * 128
    return c_tile, min(HW, max(hw_cand2, 128))


# --------------------------- fused single-pass kernel ---------------------------
def _make_ca_fused_kernel(C, HW, pool_chunk):
    # Static chunk table for the pool reduction: bounds the f32 temporary to
    # (C, pool_chunk) instead of a full-block f32 copy (matters for bf16 inputs).
    chunks = []
    off = 0
    while off < HW:
        sz = min(pool_chunk, HW - off)
        chunks.append((off, sz))
        off += sz

    inv_hw = 1.0 / HW

    def kernel(x_ref, w1_ref, b1_ref, w2_ref, b2_ref, o_ref):
        # x_ref : (1, C, HW)   HW on lanes (lane-dense), C on sublanes
        # w1_ref: (Cm, C)      b1_ref: (Cm, 1)
        # w2_ref: (C, Cm)      b2_ref: (C, 1)
        # o_ref : (1, C, HW)

        # Global average pool = chunked lane reduction, accumulated in f32.
        pooled = jnp.zeros((C, 1), jnp.float32)
        for (o, sz) in chunks:
            xc = x_ref[0, :, pl.ds(o, sz)]                                    # (C, sz)
            pooled = pooled + jnp.sum(xc.astype(jnp.float32), axis=-1, keepdims=True)
        pooled = pooled * jnp.float32(inv_hw)                                 # (C, 1)

        # Squeeze (C -> Cm), GELU, excite (Cm -> C), sigmoid — all in (·, 1)
        # orientation so the result broadcasts directly over lanes.
        z1 = jnp.dot(w1_ref[...], pooled, preferred_element_type=jnp.float32) + b1_ref[...]
        z1 = _gelu_exact(z1)                                                  # (Cm, 1)
        z2 = jnp.dot(w2_ref[...], z1, preferred_element_type=jnp.float32) + b2_ref[...]
        scale = jax.nn.sigmoid(z2)                                            # (C, 1) f32

        # Multiply with the f32 scale (no pre-cast of the attention weights),
        # cast once to the output dtype.
        o_ref[0] = (x_ref[0] * scale).astype(o_ref.dtype)

    return kernel


# --------------------------- two-pass kernels (large blocks) ---------------------------
def _make_pool_kernel(hw_total, hw_tile):
    n_t = -(-hw_total // hw_tile)                 # cdiv
    rem = hw_total - (n_t - 1) * hw_tile          # valid lanes in the final tile
    ragged = rem != hw_tile

    def kernel(x_ref, sum_ref):
        # x_ref: (1, c_tile, hw_tile)
        # sum_ref: (1, c_tile, 1) f32 accumulator, resident over the "arbitrary"
        # hw-tile grid axis (same output block index for every t).
        t = pl.program_id(2)

        @pl.when(t == 0)
        def _():
            sum_ref[...] = jnp.zeros_like(sum_ref)

        x = x_ref[0]

        if ragged:
            is_last = t == n_t - 1

            # Full tiles: plain lane reduction, no mask work.
            @pl.when(jnp.logical_not(is_last))
            def _():
                sum_ref[0] += jnp.sum(x.astype(jnp.float32), axis=-1, keepdims=True)

            # Only the final ragged tile pays for iota + compare + select.
            @pl.when(is_last)
            def _():
                col = jax.lax.broadcasted_iota(jnp.int32, x.shape, 1)
                xm = jnp.where(col < rem, x.astype(jnp.float32), 0.0)
                sum_ref[0] += jnp.sum(xm, axis=-1, keepdims=True)
        else:
            sum_ref[0] += jnp.sum(x.astype(jnp.float32), axis=-1, keepdims=True)

    return kernel


def _apply_kernel(x_ref, s_ref, o_ref):
    # x_ref: (1, c_tile, hw_tile)   s_ref: (1, c_tile, 1) f32   o_ref: like x_ref
    # Multiply in f32 (scale stays f32), cast once to the output dtype.
    o_ref[...] = (x_ref[...] * s_ref[...]).astype(o_ref.dtype)


# ------------------------------------ wrapper ------------------------------------
def ca_layer(x_nchw, w1, b1, w2, b2, *, force_two_pass=False,
             fused_max_block_bytes=None, two_pass_tile_bytes=None,
             hw_tile=None, c_tile=None):
    """Channel-attention layer (CALayer) forward.

    x_nchw : (N, C, H, W)
    w1     : (Cm, C)  = conv1.weight.squeeze(-1, -2), Cm = C // reduction
    b1     : (Cm,)
    w2     : (C, Cm)  = conv2.weight.squeeze(-1, -2)
    b2     : (C,)
    returns (N, C, H, W), same dtype as x
    """
    N, C, H, W = x_nchw.shape
    Cm = w1.shape[0]
    HW = H * W
    elt = x_nchw.dtype.itemsize

    # ---- generation-aware VMEM budget (v5e/v6e: 128 MiB, v7x: 64 MiB per TC) ----
    vmem_cap = _vmem_capacity_bytes()
    vmem_limit = max(16 * 1024 * 1024,
                     min(int(vmem_cap * 0.8), vmem_cap - 8 * 1024 * 1024))
    if fused_max_block_bytes is None:
        # Fused path VMEM: 2x(in block) + 2x(out block) double-buffered + temps.
        # vmem_limit // 5 -> ~20 MiB blocks on v5e/v6e, ~10 MiB on v7x.
        fused_max_block_bytes = vmem_limit // 5
    if two_pass_tile_bytes is None:
        # 4-8 MiB tiles: amortize per-step overhead, keep 4 buffered tiles + temps
        # well under the limit.
        two_pass_tile_bytes = min(8 * 1024 * 1024, vmem_limit // 8)

    # Free reshape: keep NCHW memory layout, merge H and W so HW maps to lanes.
    x = x_nchw.reshape(N, C, HW)

    w1f = w1.astype(jnp.float32)
    w2f = w2.astype(jnp.float32)
    b1c = b1.astype(jnp.float32).reshape(Cm, 1)
    b2c = b2.astype(jnp.float32).reshape(C, 1)

    block_bytes = C * HW * elt
    use_fused = (not force_two_pass) and block_bytes <= fused_max_block_bytes

    if use_fused:
        # Whole (C, HW) sample resident; x read from HBM exactly once.
        # Chunk size bounds the in-kernel f32 temp to ~2 MiB.
        pool_chunk = max(512, ((2 * 1024 * 1024 // max(C * 4, 1)) // 128) * 128)
        cost = pl.CostEstimate(
            flops=2 * N * C * HW + 4 * N * C * Cm,
            transcendentals=N * (C + Cm),
            bytes_accessed=2 * N * C * HW * elt + (2 * C * Cm + C + Cm) * 4,
        )
        out = pl.pallas_call(
            _make_ca_fused_kernel(C, HW, pool_chunk),
            out_shape=jax.ShapeDtypeStruct((N, C, HW), x.dtype),
            grid_spec=pltpu.PrefetchScalarGridSpec(
                num_scalar_prefetch=0,
                grid=(N,),
                in_specs=[
                    pl.BlockSpec((1, C, HW), lambda n: (n, 0, 0)),   # x per-sample
                    pl.BlockSpec((Cm, C), lambda n: (0, 0)),          # w1
                    pl.BlockSpec((Cm, 1), lambda n: (0, 0)),          # b1
                    pl.BlockSpec((C, Cm), lambda n: (0, 0)),          # w2
                    pl.BlockSpec((C, 1), lambda n: (0, 0)),           # b2
                ],
                out_specs=pl.BlockSpec((1, C, HW), lambda n: (n, 0, 0)),
            ),
            compiler_params=pltpu.CompilerParams(
                dimension_semantics=("parallel",),
                vmem_limit_bytes=vmem_limit),
            cost_estimate=cost,
        )(x, w1f, b1c, w2f, b2c)
        return out.reshape(N, C, H, W)

    # -------- two-pass path: pool kernel + tiny batched SE chain (XLA) + apply kernel --------
    if hw_tile is not None or c_tile is not None:
        c_tile = int(min(c_tile, C)) if c_tile is not None else C
        hw_tile = int(min(hw_tile, HW)) if hw_tile is not None else HW
    else:
        c_tile, hw_tile = _choose_tiles(C, HW, elt, two_pass_tile_bytes)
    n_c = pl.cdiv(C, c_tile)
    n_t = pl.cdiv(HW, hw_tile)

    pool_cost = pl.CostEstimate(
        flops=N * C * HW, transcendentals=0,
        bytes_accessed=N * C * HW * elt + N * C * 4)
    sums = pl.pallas_call(
        _make_pool_kernel(HW, hw_tile),
        out_shape=jax.ShapeDtypeStruct((N, C, 1), jnp.float32),
        grid_spec=pltpu.PrefetchScalarGridSpec(
            num_scalar_prefetch=0,
            grid=(N, n_c, n_t),
            in_specs=[pl.BlockSpec((1, c_tile, hw_tile), lambda n, c, t: (n, c, t))],
            out_specs=pl.BlockSpec((1, c_tile, 1), lambda n, c, t: (n, c, 0)),
        ),
        compiler_params=pltpu.CompilerParams(
            dimension_semantics=("parallel", "parallel", "arbitrary"),
            vmem_limit_bytes=vmem_limit),
        cost_estimate=pool_cost,
    )(x)

    # Tiny squeeze/excite chain, batched over N, in plain XLA (negligible cost).
    pooled = sums[:, :, 0] * jnp.float32(1.0 / HW)                 # (N, C)
    z1 = _gelu_exact(pooled @ w1f.T + b1c[:, 0][None, :])          # (N, Cm)
    z2 = z1 @ w2f.T + b2c[:, 0][None, :]                           # (N, C)
    scale = jax.nn.sigmoid(z2).reshape(N, C, 1)                    # (N, C, 1) f32

    apply_cost = pl.CostEstimate(
        flops=N * C * HW, transcendentals=0,
        bytes_accessed=2 * N * C * HW * elt + N * C * 4)
    out = pl.pallas_call(
        _apply_kernel,
        out_shape=jax.ShapeDtypeStruct((N, C, HW), x.dtype),
        grid_spec=pltpu.PrefetchScalarGridSpec(
            num_scalar_prefetch=0,
            grid=(N, n_c, n_t),
            in_specs=[pl.BlockSpec((1, c_tile, hw_tile), lambda n, c, t: (n, c, t)),
                      pl.BlockSpec((1, c_tile, 1), lambda n, c, t: (n, c, 0))],
            out_specs=pl.BlockSpec((1, c_tile, hw_tile), lambda n, c, t: (n, c, t)),
        ),
        compiler_params=pltpu.CompilerParams(
            dimension_semantics=("parallel", "parallel", "parallel"),
            vmem_limit_bytes=vmem_limit),
        cost_estimate=apply_cost,
    )(x, scale)
    return out.reshape(N, C, H, W)


def ca_layer_ref(x, w1, b1, w2, b2):
    """Pure-JAX reference mirroring the PyTorch forward."""
    y = jnp.mean(x, axis=(2, 3), keepdims=True)                    # (N, C, 1, 1)
    y = jnp.einsum('mc,nchw->nmhw', w1, y) + b1[None, :, None, None]
    y = 0.5 * y * (1.0 + jax.lax.erf(y * _INV_SQRT2))
    y = jnp.einsum('cm,nmhw->nchw', w2, y) + b2[None, :, None, None]
    y = jax.nn.sigmoid(y)
    return x * y


if __name__ == "__main__":
    # channel=32, reduction=4 -> mid channels = 8 ; N=2, H=W=16
    N, C, H, W = 2, 32, 16, 16
    reduction = 4
    Cm = C // reduction

    key = jax.random.PRNGKey(0)
    kx, k1, k2, k3, k4 = jax.random.split(key, 5)

    x = jax.random.normal(kx, (N, C, H, W), dtype=jnp.float32)
    w1 = 0.2 * jax.random.normal(k1, (Cm, C), dtype=jnp.float32)   # conv1 weight (1x1)
    b1 = 0.1 * jax.random.normal(k2, (Cm,), dtype=jnp.float32)     # conv1 bias
    w2 = 0.2 * jax.random.normal(k3, (C, Cm), dtype=jnp.float32)   # conv2 weight (1x1)
    b2 = 0.1 * jax.random.normal(k4, (C,), dtype=jnp.float32)      # conv2 bias

    ref = jax.block_until_ready(ca_layer_ref(x, w1, b1, w2, b2))

    # 1) Fused single-pass path (whole sample resident in VMEM, chunked pool).
    out = jax.block_until_ready(ca_layer(x, w1, b1, w2, b2))
    assert out.shape == (N, C, H, W)
    assert jnp.allclose(out, ref, atol=1e-5, rtol=1e-5), "fused path mismatch"

    # 2) Two-pass path tiled over HW (as used for large feature maps).
    out2 = jax.block_until_ready(
        ca_layer(x, w1, b1, w2, b2, force_two_pass=True, hw_tile=128))
    assert jnp.allclose(out2, ref, atol=1e-5, rtol=1e-5), "two-pass path mismatch"

    # 3) Two-pass path with a ragged final HW tile (exercises last-tile-only masking).
    H3, W3 = 16, 20                                                # HW = 320 = 2*128 + 64
    x3 = jax.random.normal(kx, (N, C, H3, W3), dtype=jnp.float32)
    ref3 = jax.block_until_ready(ca_layer_ref(x3, w1, b1, w2, b2))
    out3 = jax.block_until_ready(
        ca_layer(x3, w1, b1, w2, b2, force_two_pass=True, hw_tile=128))
    assert jnp.allclose(out3, ref3, atol=1e-5, rtol=1e-5), "masked two-pass mismatch"

    # 4) Two-pass path with channel tiling + ragged channel blocks
    #    (tiny tile budget forces the C-tiling branch: c_tile=24, hw_tile=HW).
    out4 = jax.block_until_ready(
        ca_layer(x3, w1, b1, w2, b2, force_two_pass=True,
                 two_pass_tile_bytes=32 * 1024))
    assert jnp.allclose(out4, ref3, atol=1e-5, rtol=1e-5), "c-tiled two-pass mismatch"

    print("KERNEL_OK")
</pallas_src>

<mosaic_0001>
module attributes {stable_mosaic.version = 11 : i64} {
  func.func @kernel(%arg0: i32, %arg1: memref<1x32x256xf32, #tpu.memory_space<vmem>>, %arg2: memref<8x32xf32, #tpu.memory_space<vmem>>, %arg3: memref<8x1xf32, #tpu.memory_space<vmem>>, %arg4: memref<32x8xf32, #tpu.memory_space<vmem>>, %arg5: memref<32x1xf32, #tpu.memory_space<vmem>>, %arg6: memref<1x32x256xf32, #tpu.memory_space<vmem>>) attributes {dimension_semantics = [#tpu.dimension_semantics<parallel>], iteration_bounds = array<i64: 2>, scalar_prefetch = 0 : i64, scratch_operands = 0 : i64, tpu.core_type = #tpu.core_type<tc>, window_params = [{transform_indices = @transform_0, window_bounds = array<i64: 1, 32, 256>}, {pipeline_mode = #tpu.pipeline_mode<synchronous>, transform_indices = @transform_1, window_bounds = array<i64: 8, 32>}, {pipeline_mode = #tpu.pipeline_mode<synchronous>, transform_indices = @transform_2, window_bounds = array<i64: 8, 1>}, {pipeline_mode = #tpu.pipeline_mode<synchronous>, transform_indices = @transform_3, window_bounds = array<i64: 32, 8>}, {pipeline_mode = #tpu.pipeline_mode<synchronous>, transform_indices = @transform_4, window_bounds = array<i64: 32, 1>}, {transform_indices = @transform_5, window_bounds = array<i64: 1, 32, 256>}]} {
    %cst = arith.constant 0.000000e+00 : f32
    %0 = vector.broadcast %cst : f32 to vector<32x1xf32>
    %c0 = arith.constant 0 : index
    %c0_0 = arith.constant 0 : index
    %c0_1 = arith.constant 0 : index
    %1 = vector.load %arg1[%c0, %c0_0, %c0_1] : memref<1x32x256xf32, #tpu.memory_space<vmem>>, vector<1x32x256xf32>
    %2 = vector.shape_cast %1 : vector<1x32x256xf32> to vector<32x256xf32>
    %cst_2 = arith.constant dense<0.000000e+00> : vector<32xf32>
    %3 = vector.multi_reduction <add>, %2, %cst_2 [1] : vector<32x256xf32> to vector<32xf32>
    %4 = vector.shape_cast %3 : vector<32xf32> to vector<32x1xf32>
    %5 = arith.addf %0, %4 : vector<32x1xf32>
    %cst_3 = arith.constant 3.906250e-03 : f32
    %6 = vector.broadcast %cst_3 : f32 to vector<32x1xf32>
    %7 = arith.mulf %5, %6 : vector<32x1xf32>
    %c0_4 = arith.constant 0 : index
    %c0_5 = arith.constant 0 : index
    %8 = vector.load %arg2[%c0_4, %c0_5] : memref<8x32xf32, #tpu.memory_space<vmem>>, vector<8x32xf32>
    %cst_6 = arith.constant dense<0.000000e+00> : vector<8x1xf32>
    %9 = tpu.matmul %8, %7, %cst_6 {dimension_numbers = #tpu.dot_dimension_numbers<[1], [0], [0], [1], [0, 0, 1, 1], [], []>} : vector<8x32xf32>, vector<32x1xf32>, vector<8x1xf32> -> vector<8x1xf32>
    %c0_7 = arith.constant 0 : index
    %c0_8 = arith.constant 0 : index
    %10 = vector.load %arg3[%c0_7, %c0_8] : memref<8x1xf32, #tpu.memory_space<vmem>>, vector<8x1xf32>
    %11 = arith.addf %9, %10 : vector<8x1xf32>
    %cst_9 = arith.constant 5.000000e-01 : f32
    %12 = vector.broadcast %cst_9 : f32 to vector<8x1xf32>
    %13 = arith.mulf %12, %11 : vector<8x1xf32>
    %cst_10 = arith.constant 0.707106769 : f32
    %14 = vector.broadcast %cst_10 : f32 to vector<8x1xf32>
    %15 = arith.mulf %11, %14 : vector<8x1xf32>
    %16 = math.erf %15 : vector<8x1xf32>
    %cst_11 = arith.constant 1.000000e+00 : f32
    %17 = vector.broadcast %cst_11 : f32 to vector<8x1xf32>
    %18 = arith.addf %17, %16 : vector<8x1xf32>
    %19 = arith.mulf %13, %18 : vector<8x1xf32>
    %c0_12 = arith.constant 0 : index
    %c0_13 = arith.constant 0 : index
    %20 = vector.load %arg4[%c0_12, %c0_13] : memref<32x8xf32, #tpu.memory_space<vmem>>, vector<32x8xf32>
    %cst_14 = arith.constant dense<0.000000e+00> : vector<32x1xf32>
    %21 = tpu.matmul %20, %19, %cst_14 {dimension_numbers = #tpu.dot_dimension_numbers<[1], [0], [0], [1], [0, 0, 1, 1], [], []>} : vector<32x8xf32>, vector<8x1xf32>, vector<32x1xf32> -> vector<32x1xf32>
    %c0_15 = arith.constant 0 : index
    %c0_16 = arith.constant 0 : index
    %22 = vector.load %arg5[%c0_15, %c0_16] : memref<32x1xf32, #tpu.memory_space<vmem>>, vector<32x1xf32>
    %23 = arith.addf %21, %22 : vector<32x1xf32>
    %24 = arith.negf %23 : vector<32x1xf32>
    %25 = math.exp %24 : vector<32x1xf32>
    %cst_17 = arith.constant 1.000000e+00 : f32
    %26 = vector.broadcast %cst_17 : f32 to vector<32x1xf32>
    %27 = arith.addf %26, %25 : vector<32x1xf32>
    %28 = arith.divf %26, %27 : vector<32x1xf32>
    %c0_18 = arith.constant 0 : index
    %c0_19 = arith.constant 0 : index
    %c0_20 = arith.constant 0 : index
    %29 = vector.load %arg1[%c0_18, %c0_19, %c0_20] : memref<1x32x256xf32, #tpu.memory_space<vmem>>, vector<1x32x256xf32>
    %30 = vector.shape_cast %29 : vector<1x32x256xf32> to vector<32x256xf32>
    %31 = vector.broadcast %28 : vector<32x1xf32> to vector<32x256xf32>
    %32 = arith.mulf %30, %31 : vector<32x256xf32>
    %c0_21 = arith.constant 0 : index
    %c0_22 = arith.constant 0 : index
    %c0_23 = arith.constant 0 : index
    %33 = vector.load %arg6[%c0_21, %c0_22, %c0_23] : memref<1x32x256xf32, #tpu.memory_space<vmem>>, vector<1x32x256xf32>
    %34 = vector.shape_cast %33 : vector<1x32x256xf32> to vector<32x256xf32>
    %35 = vector.shape_cast %32 : vector<32x256xf32> to vector<1x32x256xf32>
    tpu.vector_store %arg6[%c0_21, %c0_22, %c0_23], %35 {strides = array<i32>} : memref<1x32x256xf32, #tpu.memory_space<vmem>>, vector<1x32x256xf32>,
    return
  }
  func.func @transform_0(%arg0: i32) -> (i32, i32, i32) {
    %c0_i32 = arith.constant 0 : i32
    %c0_i32_0 = arith.constant 0 : i32
    %c0_i32_1 = arith.constant 0 : i32
    return %arg0, %c0_i32, %c0_i32_0 : i32, i32, i32
  }
  func.func @transform_1(%arg0: i32) -> (i32, i32) {
    %c0_i32 = arith.constant 0 : i32
    %c0_i32_0 = arith.constant 0 : i32
    %c0_i32_1 = arith.constant 0 : i32
    return %c0_i32, %c0_i32_0 : i32, i32
  }
  func.func @transform_2(%arg0: i32) -> (i32, i32) {
    %c0_i32 = arith.constant 0 : i32
    %c0_i32_0 = arith.constant 0 : i32
    %c0_i32_1 = arith.constant 0 : i32
    return %c0_i32, %c0_i32_0 : i32, i32
  }
  func.func @transform_3(%arg0: i32) -> (i32, i32) {
    %c0_i32 = arith.constant 0 : i32
    %c0_i32_0 = arith.constant 0 : i32
    %c0_i32_1 = arith.constant 0 : i32
    return %c0_i32, %c0_i32_0 : i32, i32
  }
  func.func @transform_4(%arg0: i32) -> (i32, i32) {
    %c0_i32 = arith.constant 0 : i32
    %c0_i32_0 = arith.constant 0 : i32
    %c0_i32_1 = arith.constant 0 : i32
    return %c0_i32, %c0_i32_0 : i32, i32
  }
  func.func @transform_5(%arg0: i32) -> (i32, i32, i32) {
    %c0_i32 = arith.constant 0 : i32
    %c0_i32_0 = arith.constant 0 : i32
    %c0_i32_1 = arith.constant 0 : i32
    return %arg0, %c0_i32, %c0_i32_0 : i32, i32, i32
  }
}

</mosaic_0001>

<llo_original>
// kernel: tpu_custom_call.1
$region0: #{tpu_custom_call.1}
  #allocation0 [shape = 'u32[]', space=smem, size = 0x4, offset = 0x4, fixed_abs, tag = 'smem constant byte address 0x4 - core index']
  #allocation1 [shape = 'u32[144,128]{1,0:T(1,128)}', space=vmem, size = 0x12000, scoped, tag = 'internal scratch']
  %s0 = inlined_call_operand.hbm [shape: f32[2,32,256], index: 0, kind: input, shape index: {}]
  %s1 = inlined_call_operand.vmem [shape: f32[8,32], index: 1, kind: input, shape index: {}]
  %s2 = inlined_call_operand.vmem [shape: f32[8,1], index: 2, kind: input, shape index: {}]
  %s3 = inlined_call_operand.vmem [shape: f32[32,8], index: 3, kind: input, shape index: {}]
  %s4 = inlined_call_operand.vmem [shape: f32[32,1], index: 4, kind: input, shape index: {}]
  %s5 = inlined_call_operand.hbm [shape: f32[2,32,256], index: 5, kind: output, shape index: {}]
  %s6 = sld [smem:[#allocation0]]
  $region57: #{tpu_custom_call.1} parent=0
    _
  %s8 = ssub.s32 1, %s6
  %s9 = scalar_select 0, %s8, %s6
  $region1: #{tpu_custom_call.1} parent=0
    #allocation2 [shape = 'u8[65536]{0}', space=vmem, size = 0x10000, scoped, tag = 'input window, operand 0']
    #allocation3 [shape = 's32[2]{0}', space=sflag, size = 0x8, scoped, tag = 'scoped memory for tpu_custom_call.1']
    #allocation4 [shape = 's32[2]{0}', space=sflag, size = 0x8, scoped, tag = 'scoped memory for tpu_custom_call.1']
    #allocation5 [shape = 'u8[65536]{0}', space=vmem, size = 0x10000, scoped, tag = 'output window, operand 0']
    %10 = vsyncpa [#allocation3], 0
    %s11 = scalar_lea.sflag [#allocation3], 1
    %12 = vsyncpa %s11, 0
    %13 = vsyncpa [#allocation4], 0
    %s14 = scalar_lea.sflag [#allocation4], 1
    %15 = vsyncpa %s14, 0
    loop: start=0, step=1, limit=4
    $region2: #{tpu_custom_call.1} parent=1 // loop_pre_header
      _
    $region3: #{tpu_custom_call.1} parent=1 // loop_header
      %s17 = sphi 0, %s21
      %p18 = scmp.ge.s32.totalorder %s17, 4
      %s27 = sphi 0, %s29
      %s30 = sphi 0, %s27
      %s31 = sphi 0, %s30
      %s47 = sphi 0, %s31
      %s51 = sphi 0, %s51
      %s53 = sphi 0, %s51
      %s54 = sphi 0, %s53
      %s68 = sphi 0, %s54
      %s72 = sphi 0, %s72
      %s74 = sphi 0, %s72
      %s75 = sphi 0, %s74
      %s89 = sphi 0, %s75
      %s93 = sphi 0, %s93
      %s95 = sphi 0, %s93
      %s96 = sphi 0, %s95
      %s110 = sphi 0, %s96
      %s114 = sphi 0, %s114
      %s116 = sphi 0, %s114
      %s117 = sphi 0, %s116
      %s131 = sphi 0, %s117
      %s137 = sphi 0, %s139
      %s140 = sphi 0, %s137
      %s141 = sphi 0, %s140
      %s157 = sphi 0, %s141
    $region4: #{tpu_custom_call.1} parent=1 // loop_header_branch
      %20 = sbr.rel (%p18) target = $region8
    $region5: #{tpu_custom_call.1} parent=1 // loop_body
      %s22 = ssub.s32 %s17, 1
      %s23 = ssub.s32 %s17, 2
      %s24 = sadd.s32 %s17, 1
      %s25 = ssub.s32 %s17, %s24
      %p26 = scmp.eq.s32.totalorder %s25, 0
      %s28 = sadd.s32 %s27, 1
      %s29 = scalar_select %p26, %s27, %s28
      %p32 = pneg %p26
      %p33 = scmp.eq.s32.totalorder %s17, 1
      %p34 = por %p32, %p33
      %p35 = scmp.ne.s32.totalorder %s27, %s30
      %p36 = scmp.eq.s32.totalorder %s17, 0
      %p37 = por %p35, %p36
      %p38 = scmp.ne.s32.totalorder %s27, %s30
      %p39 = scmp.eq.s32.totalorder %s22, 1
      %p40 = por %p38, %p39
      %p41 = scmp.ne.s32.totalorder %s30, %s31
      %p42 = scmp.eq.s32.totalorder %s22, 0
      %p43 = por %p41, %p42
      %p44 = scmp.ne.s32.totalorder %s30, %s31
      %p45 = scmp.eq.s32.totalorder %s23, 1
      %p46 = por %p44, %p45
      %p48 = scmp.ne.s32.totalorder %s31, %s47
      %p49 = scmp.eq.s32.totalorder %s23, 0
      %p50 = por %p48, %p49
      %s52 = sadd.s32 %s51, 1
      %p55 = scmp.eq.s32.totalorder %s17, 1
      %p56 = scmp.ne.s32.totalorder %s51, %s53
      %p57 = scmp.eq.s32.totalorder %s17, 0
      %p58 = por %p56, %p57
      %p59 = scmp.ne.s32.totalorder %s51, %s53
      %p60 = scmp.eq.s32.totalorder %s22, 1
      %p61 = por %p59, %p60
      %p62 = scmp.ne.s32.totalorder %s53, %s54
      %p63 = scmp.eq.s32.totalorder %s22, 0
      %p64 = por %p62, %p63
      %p65 = scmp.ne.s32.totalorder %s53, %s54
      %p66 = scmp.eq.s32.totalorder %s23, 1
      %p67 = por %p65, %p66
      %p69 = scmp.ne.s32.totalorder %s54, %s68
      %p70 = scmp.eq.s32.totalorder %s23, 0
      %p71 = por %p69, %p70
      %s73 = sadd.s32 %s72, 1
      %p76 = scmp.eq.s32.totalorder %s17, 1
      %p77 = scmp.ne.s32.totalorder %s72, %s74
      %p78 = scmp.eq.s32.totalorder %s17, 0
      %p79 = por %p77, %p78
      %p80 = scmp.ne.s32.totalorder %s72, %s74
      %p81 = scmp.eq.s32.totalorder %s22, 1
      %p82 = por %p80, %p81
      %p83 = scmp.ne.s32.totalorder %s74, %s75
      %p84 = scmp.eq.s32.totalorder %s22, 0
      %p85 = por %p83, %p84
      %p86 = scmp.ne.s32.totalorder %s74, %s75
      %p87 = scmp.eq.s32.totalorder %s23, 1
      %p88 = por %p86, %p87
      %p90 = scmp.ne.s32.totalorder %s75, %s89
      %p91 = scmp.eq.s32.totalorder %s23, 0
      %p92 = por %p90, %p91
      %s94 = sadd.s32 %s93, 1
      %p97 = scmp.eq.s32.totalorder %s17, 1
      %p98 = scmp.ne.s32.totalorder %s93, %s95
      %p99 = scmp.eq.s32.totalorder %s17, 0
      %p100 = por %p98, %p99
      %p101 = scmp.ne.s32.totalorder %s93, %s95
      %p102 = scmp.eq.s32.totalorder %s22, 1
      %p103 = por %p101, %p102
      %p104 = scmp.ne.s32.totalorder %s95, %s96
      %p105 = scmp.eq.s32.totalorder %s22, 0
      %p106 = por %p104, %p105
      %p107 = scmp.ne.s32.totalorder %s95, %s96
      %p108 = scmp.eq.s32.totalorder %s23, 1
      %p109 = por %p107, %p108
      %p111 = scmp.ne.s32.totalorder %s96, %s110
      %p112 = scmp.eq.s32.totalorder %s23, 0
      %p113 = por %p111, %p112
      %s115 = sadd.s32 %s114, 1
      %p118 = scmp.eq.s32.totalorder %s17, 1
      %p119 = scmp.ne.s32.totalorder %s114, %s116
      %p120 = scmp.eq.s32.totalorder %s17, 0
      %p121 = por %p119, %p120
      %p122 = scmp.ne.s32.totalorder %s114, %s116
      %p123 = scmp.eq.s32.totalorder %s22, 1
      %p124 = por %p122, %p123
      %p125 = scmp.ne.s32.totalorder %s116, %s117
      %p126 = scmp.eq.s32.totalorder %s22, 0
      %p127 = por %p125, %p126
      %p128 = scmp.ne.s32.totalorder %s116, %s117
      %p129 = scmp.eq.s32.totalorder %s23, 1
      %p130 = por %p128, %p129
      %p132 = scmp.ne.s32.totalorder %s117, %s131
      %p133 = scmp.eq.s32.totalorder %s23, 0
      %p134 = por %p132, %p133
      %s135 = ssub.s32 %s17, %s24
      %p136 = scmp.eq.s32.totalorder %s135, 0
      %s138 = sadd.s32 %s137, 1
      %s139 = scalar_select %p136, %s137, %s138
      %p142 = pneg %p136
      %p143 = scmp.eq.s32.totalorder %s17, 1
      %p144 = por %p142, %p143
      %p145 = scmp.ne.s32.totalorder %s137, %s140
      %p146 = scmp.eq.s32.totalorder %s17, 0
      %p147 = por %p145, %p146
      %p148 = scmp.ne.s32.totalorder %s137, %s140
      %p149 = scmp.eq.s32.totalorder %s22, 1
      %p150 = por %p148, %p149
      %p151 = scmp.ne.s32.totalorder %s140, %s141
      %p152 = scmp.eq.s32.totalorder %s22, 0
      %p153 = por %p151, %p152
      %p154 = scmp.ne.s32.totalorder %s140, %s141
      %p155 = scmp.eq.s32.totalorder %s23, 1
      %p156 = por %p154, %p155
      %p158 = scmp.ne.s32.totalorder %s141, %s157
      %p159 = scmp.eq.s32.totalorder %s23, 0
      %p160 = por %p158, %p159
      %p161 = scmp.le.s32.totalorder 1, %s17
      %p162 = scmp.lt.s32.totalorder %s17, 3
      %p163 = pnand %p161, %p162
      %p164 = pneg %p163
      // Predicated region
      $region9: #{tpu_custom_call.1} parent=5 // pred_check
        _
      $region10: #{tpu_custom_call.1} parent=5 // pred_check_branch
        %166 = sbr.rel (%p163) target = $region12
      $region11: #{tpu_custom_call.1} parent=5 // pred_region
        %s167 = ssub.s32 %s17, 1
        // Predicated region
        $region13: #{tpu_custom_call.1} parent=11 // pred_check
          %p168 = pneg %p64
        $region14: #{tpu_custom_call.1} parent=11 // pred_check_branch
          %170 = sbr.rel (%p168) target = $region16
        $region15: #{tpu_custom_call.1} parent=11 // pred_region
          _
        $region16: #{tpu_custom_call.1} parent=11 // pred_fallthru
          _
        // Predicated region
        $region17: #{tpu_custom_call.1} parent=11 // pred_check
          %p171 = pneg %p85
        $region18: #{tpu_custom_call.1} parent=11 // pred_check_branch
          %173 = sbr.rel (%p171) target = $region20
        $region19: #{tpu_custom_call.1} parent=11 // pred_region
          _
        $region20: #{tpu_custom_call.1} parent=11 // pred_fallthru
          _
        // Predicated region
        $region21: #{tpu_custom_call.1} parent=11 // pred_check
          %p174 = pneg %p106
        $region22: #{tpu_custom_call.1} parent=11 // pred_check_branch
          %176 = sbr.rel (%p174) target = $region24
        $region23: #{tpu_custom_call.1} parent=11 // pred_region
          _
        $region24: #{tpu_custom_call.1} parent=11 // pred_fallthru
          _
        // Predicated region
        $region25: #{tpu_custom_call.1} parent=11 // pred_check
          %p177 = pneg %p127
        $region26: #{tpu_custom_call.1} parent=11 // pred_check_branch
          %179 = sbr.rel (%p177) target = $region28
        $region27: #{tpu_custom_call.1} parent=11 // pred_region
          _
        $region28: #{tpu_custom_call.1} parent=11 // pred_fallthru
          _
      $region12: #{tpu_custom_call.1} parent=5 // pred_fallthru
        _
      %p180 = scmp.lt.s32.totalorder %s17, 2
      // Predicated region
      $region29: #{tpu_custom_call.1} parent=5 // pred_check
        %p181 = pneg %p180
      $region30: #{tpu_custom_call.1} parent=5 // pred_check_branch
        %183 = sbr.rel (%p181) target = $region32
      $region31: #{tpu_custom_call.1} parent=5 // pred_region
        // Predicated region
        $region33: #{tpu_custom_call.1} parent=31 // pred_check
          %p184 = pneg %p37
        $region34: #{tpu_custom_call.1} parent=31 // pred_check_branch
          %186 = sbr.rel (%p184) target = $region36
        $region35: #{tpu_custom_call.1} parent=31 // pred_region
          %s187 = sand.u32 %s27, 1
          %s188 = scalar_lea.sflag [#allocation3], %s187
          %s189 = sand.u32 %s27, 1
          %s190 = smul.addr %s189, 64
          %s191 = scalar_lea.vmem [#allocation2], %s190
          %s193 = ssub.s32 1024, 1024
          %194 = vsyncadd %s188, %s193
          %s195 = smul.addr %s17, 8
          %s196 = smul.addr %s195, 128
          %s197 = scalar_lea.hbm %s0, %s196
          %s198 = sshll.u32 %s191, 4
          %s199 = int_to_ptr.vmem [resolvable:$true] %s198
          %204 = dma.hbm_to_vmem [thread:$0]  %s197, 1024, %s199, %s188, 256, 256, 16
        $region36: #{tpu_custom_call.1} parent=31 // pred_fallthru
          _
      $region32: #{tpu_custom_call.1} parent=5 // pred_fallthru
        _
      %p205 = scmp.le.s32.totalorder 1, %s17
      %p206 = scmp.lt.s32.totalorder %s17, 3
      %p207 = pnand %p205, %p206
      %p208 = pneg %p207
      // Predicated region
      $region37: #{tpu_custom_call.1} parent=5 // pred_check
        _
      $region38: #{tpu_custom_call.1} parent=5 // pred_check_branch
        %210 = sbr.rel (%p207) target = $region40
      $region39: #{tpu_custom_call.1} parent=5 // pred_region
        %s211 = ssub.s32 %s17, 1
        %s212 = sand.u32 %s30, 1
        %s213 = scalar_lea.sflag [#allocation3], %s212
        %s214 = sand.u32 %s30, 1
        %s215 = smul.addr %s214, 64
        %s216 = scalar_lea.vmem [#allocation2], %s215
        // Predicated region
        $region41: #{tpu_custom_call.1} parent=39 // pred_check
          %p217 = pneg %p43
        $region42: #{tpu_custom_call.1} parent=39 // pred_check_branch
          %219 = sbr.rel (%p217) target = $region44
        $region43: #{tpu_custom_call.1} parent=39 // pred_region
          %220 = dma.done %s213, 1024
        $region44: #{tpu_custom_call.1} parent=39 // pred_fallthru
          _
        %s221 = sand.u32 %s30, 1
        %s222 = scalar_lea.sflag [#allocation3], %s221
        %s223 = sand.u32 %s30, 1
        %s224 = smul.addr %s223, 64
        %s225 = scalar_lea.vmem [#allocation2], %s224
        %p226 = pneg %p43
        %p227 = pneg %p40
        %p228 = pneg %p64
        %p229 = pneg %p61
        %p230 = pneg %p85
        %p231 = pneg %p82
        %p232 = pneg %p106
        %p233 = pneg %p103
        %p234 = pneg %p127
        %p235 = pneg %p124
        %p236 = pneg %p153
        %p237 = pneg %p150
        %s238 = sand.u32 %s140, 1
        %s239 = scalar_lea.sflag [#allocation4], %s238
        %s240 = sand.u32 %s140, 1
        %s241 = smul.addr %s240, 64
        %s242 = scalar_lea.vmem [#allocation5], %s241
        %v243 = vld [vmem:[%s216] sm:$0xff]
        %v244 = vld [vmem:[%s216 + $0x8] sm:$0xff]
        %v245 = vld [vmem:[%s216 + $0x10] sm:$0xff]
        %v246 = vld [vmem:[%s216 + $0x18] sm:$0xff]
        %v247 = vld [vmem:[%s216 + $0x20] sm:$0xff]
        %v248 = vld [vmem:[%s216 + $0x28] sm:$0xff]
        %v249 = vld [vmem:[%s216 + $0x30] sm:$0xff]
        %v250 = vld [vmem:[%s216 + $0x38] sm:$0xff]
        %v251 = vadd.f32 %v243, %v244
        %252 = vadd.xlane.f32.xlu0 %v251
        %v253 = vpop.xlane.xlu0 %252
        %v254 = vadd.f32 %v245, %v246
        %255 = vadd.xlane.f32.xlu0 %v254
        %v256 = vpop.xlane.xlu0 %255
        %v257 = vadd.f32 %v247, %v248
        %258 = vadd.xlane.f32.xlu0 %v257
        %v259 = vpop.xlane.xlu0 %258
        %v260 = vadd.f32 %v249, %v250
        %261 = vadd.xlane.f32.xlu0 %v260
        %v262 = vpop.xlane.xlu0 %261
        %v263 = vadd.f32 %v253, 0.0
        %v264 = vadd.f32 %v256, 0.0
        %v265 = vadd.f32 %v259, 0.0
        %v266 = vadd.f32 %v262, 0.0
        %v267 = vmul.f32 %v263, 0.00390625
        %v268 = vmul.f32 %v264, 0.00390625
        %v269 = vmul.f32 %v265, 0.00390625
        %v270 = vmul.f32 %v266, 0.00390625
        %v271 = vld [vmem:[%s1] sm:$0xff]
        %v272 = vld [vmem:[%s2] sm:$0xff]
        %vm273 = vcmask 261120
        %v275 = vsel %vm273, %v271, 0
        %277 = vmatprep.subr.mxu0 0.0
        %278 = vmatpush1.msra.mxu0 %v267
        %279 = vmatprep.subr.mxu0 0.0
        %280 = vmatpush1.msra.mxu0 %v268
        %281 = vmatprep.subr.mxu0 0.0
        %282 = vmatpush1.msra.mxu0 %v269
        %283 = vmatprep.subr.mxu0 0.0
        %284 = vmatpush1.msra.mxu0 %v270
        %285 = vmatprep.subr.mxu0 0.0
        %286 = vmatpush1.msra.mxu0 0.0
        %287 = vmatprep.subr.mxu0 0.0
        %288 = vmatpush1.msra.mxu0 0.0
        %289 = vmatprep.subr.mxu0 0.0
        %290 = vmatpush1.msra.mxu0 0.0
        %291 = vmatprep.subr.mxu0 0.0
        %292 = vmatpush1.msra.mxu0 0.0
        %293 = vmatprep.subr.mxu0 0.0
        %294 = vmatpush1.msra.mxu0 0.0
        %295 = vmatprep.subr.mxu0 0.0
        %296 = vmatpush1.msra.mxu0 0.0
        %297 = vmatprep.subr.mxu0 0.0
        %298 = vmatpush1.msra.mxu0 0.0
        %299 = vmatprep.subr.mxu0 0.0
        %300 = vmatpush1.msra.mxu0 0.0
        %301 = vmatprep.subr.mxu0 0.0
        %302 = vmatpush1.msra.mxu0 0.0
        %303 = vmatprep.subr.mxu0 0.0
        %304 = vmatpush1.msra.mxu0 0.0
        %305 = vmatprep.subr.mxu0 0.0
        %306 = vmatpush1.msra.mxu0 0.0
        %307 = vmatprep.subr.mxu0 0.0
        %308 = vmatpush1.msra.mxu0 0.0
        %309 = vmatprep.subr.mxu0 0.0
        %310 = vmatpush1.msra.mxu0 0.0
        %311 = vmatprep.subr.mxu0 0.0
        %312 = vmatpush1.msra.mxu0 0.0
        %313 = vmatprep.subr.mxu0 0.0
        %314 = vmatpush1.msra.mxu0 0.0
        %315 = vmatprep.subr.mxu0 0.0
        %316 = vmatpush1.msra.mxu0 0.0
        %317 = vmatprep.subr.mxu0 0.0
        %318 = vmatpush1.msra.mxu0 0.0
        %319 = vmatprep.subr.mxu0 0.0
        %320 = vmatpush1.msra.mxu0 0.0
        %321 = vmatprep.subr.mxu0 0.0
        %322 = vmatpush1.msra.mxu0 0.0
        %323 = vmatprep.subr.mxu0 0.0
        %324 = vmatpush1.msra.mxu0 0.0
        %325 = vmatprep.subr.mxu0 0.0
        %326 = vmatpush1.msra.mxu0 0.0
        %327 = vmatprep.subr.mxu0 0.0
        %328 = vmatpush1.msra.mxu0 0.0
        %329 = vmatprep.subr.mxu0 0.0
        %330 = vmatpush1.msra.mxu0 0.0
        %331 = vmatprep.subr.mxu0 0.0
        %332 = vmatpush1.msra.mxu0 0.0
        %333 = vmatprep.subr.mxu0 0.0
        %334 = vmatpush1.msra.mxu0 0.0
        %335 = vmatprep.subr.mxu0 0.0
        %336 = vmatpush1.msra.mxu0 0.0
        %337 = vmatprep.subr.mxu0 0.0
        %338 = vmatpush1.msra.mxu0 0.0
        %339 = vmatprep.subr.mxu0 0.0
        %340 = vmatpush1.msra.mxu0 0.0
        %341 = vmatprep.mubr.f32.mxu0 0.0
        %342 = vmatmul.mubr.f32.gmra.mrb[0].mxu0 %v275
        %v343 = vpop.f32.mrb[0].mxu0
        %v344 = vadd.f32 %v272, %v343
        %v345 = vpop.f32.mrb[0].mxu0
        %346 = vdwg.mxu0
        %v347 = vmul.f32 %v344, 0.5
        %v348 = vmul.f32 %v344, 0.70710677
        %v349 = verf.f32.pop %v348
        %v350 = vadd.f32 %v349, 1.0
        %v351 = vmul.f32 %v347, %v350
        %v352 = vld [vmem:[%s3] sm:$0xff]
        %v353 = vld [vmem:[%s3 + $0x8] sm:$0xff]
        %v354 = vld [vmem:[%s3 + $0x10] sm:$0xff]
        %v355 = vld [vmem:[%s3 + $0x18] sm:$0xff]
        %v356 = vld [vmem:[%s4] sm:$0xff]
        %v357 = vld [vmem:[%s4 + $0x8] sm:$0xff]
        %v358 = vld [vmem:[%s4 + $0x10] sm:$0xff]
        %v359 = vld [vmem:[%s4 + $0x18] sm:$0xff]
        %vm360 = vcmask 64512
        %v362 = vsel %vm360, %v352, 0
        %v365 = vsel %vm360, %v353, 0
        %v368 = vsel %vm360, %v354, 0
        %v371 = vsel %vm360, %v355, 0
        %373 = vmatprep.subr.mxu0 0.0
        %374 = vmatpush1.msra.mxu0 %v351
        %375 = vmatprep.subr.mxu0 0.0
        %376 = vmatpush1.msra.mxu0 0.0
        %377 = vmatprep.subr.mxu0 0.0
        %378 = vmatpush1.msra.mxu0 0.0
        %379 = vmatprep.subr.mxu0 0.0
        %380 = vmatpush1.msra.mxu0 0.0
        %381 = vmatprep.subr.mxu0 0.0
        %382 = vmatpush1.msra.mxu0 0.0
        %383 = vmatprep.subr.mxu0 0.0
        %384 = vmatpush1.msra.mxu0 0.0
        %385 = vmatprep.subr.mxu0 0.0
        %386 = vmatpush1.msra.mxu0 0.0
        %387 = vmatprep.subr.mxu0 0.0
        %388 = vmatpush1.msra.mxu0 0.0
        %389 = vmatprep.subr.mxu0 0.0
        %390 = vmatpush1.msra.mxu0 0.0
        %391 = vmatprep.subr.mxu0 0.0
        %392 = vmatpush1.msra.mxu0 0.0
        %393 = vmatprep.subr.mxu0 0.0
        %394 = vmatpush1.msra.mxu0 0.0
        %395 = vmatprep.subr.mxu0 0.0
        %396 = vmatpush1.msra.mxu0 0.0
        %397 = vmatprep.subr.mxu0 0.0
        %398 = vmatpush1.msra.mxu0 0.0
        %399 = vmatprep.subr.mxu0 0.0
        %400 = vmatpush1.msra.mxu0 0.0
        %401 = vmatprep.subr.mxu0 0.0
        %402 = vmatpush1.msra.mxu0 0.0
        %403 = vmatprep.subr.mxu0 0.0
        %404 = vmatpush1.msra.mxu0 0.0
        %405 = vmatprep.subr.mxu0 0.0
        %406 = vmatpush1.msra.mxu0 0.0
        %407 = vmatprep.subr.mxu0 0.0
        %408 = vmatpush1.msra.mxu0 0.0
        %409 = vmatprep.subr.mxu0 0.0
        %410 = vmatpush1.msra.mxu0 0.0
        %411 = vmatprep.subr.mxu0 0.0
        %412 = vmatpush1.msra.mxu0 0.0
        %413 = vmatprep.subr.mxu0 0.0
        %414 = vmatpush1.msra.mxu0 0.0
        %415 = vmatprep.subr.mxu0 0.0
        %416 = vmatpush1.msra.mxu0 0.0
        %417 = vmatprep.subr.mxu0 0.0
        %418 = vmatpush1.msra.mxu0 0.0
        %419 = vmatprep.subr.mxu0 0.0
        %420 = vmatpush1.msra.mxu0 0.0
        %421 = vmatprep.subr.mxu0 0.0
        %422 = vmatpush1.msra.mxu0 0.0
        %423 = vmatprep.subr.mxu0 0.0
        %424 = vmatpush1.msra.mxu0 0.0
        %425 = vmatprep.subr.mxu0 0.0
        %426 = vmatpush1.msra.mxu0 0.0
        %427 = vmatprep.subr.mxu0 0.0
        %428 = vmatpush1.msra.mxu0 0.0
        %429 = vmatprep.subr.mxu0 0.0
        %430 = vmatpush1.msra.mxu0 0.0
        %431 = vmatprep.subr.mxu0 0.0
        %432 = vmatpush1.msra.mxu0 0.0
        %433 = vmatprep.subr.mxu0 0.0
        %434 = vmatpush1.msra.mxu0 0.0
        %435 = vmatprep.subr.mxu0 0.0
        %436 = vmatpush1.msra.mxu0 0.0
        %437 = vmatprep.mubr.f32.mxu0 0.0
        %438 = vmatmul.mubr.f32.gmra.mrb[0].mxu0 %v362
        %v439 = vpop.f32.mrb[0].mxu0
        %v440 = vadd.f32 %v356, %v439
        %v441 = vpop.f32.mrb[0].mxu0
        %442 = vmatprep.mubr.f32.mxu0 0.0
        %443 = vmatmul.mubr.f32.gmra.mrb[0].mxu0 %v365
        %v444 = vpop.f32.mrb[0].mxu0
        %v445 = vadd.f32 %v357, %v444
        %v446 = vpop.f32.mrb[0].mxu0
        %447 = vmatprep.mubr.f32.mxu0 0.0
        %448 = vmatmul.mubr.f32.gmra.mrb[0].mxu0 %v368
        %v449 = vpop.f32.mrb[0].mxu0
        %v450 = vadd.f32 %v358, %v449
        %v451 = vpop.f32.mrb[0].mxu0
        %452 = vmatprep.mubr.f32.mxu0 0.0
        %453 = vmatmul.mubr.f32.gmra.mrb[0].mxu0 %v371
        %v454 = vpop.f32.mrb[0].mxu0
        %v455 = vadd.f32 %v359, %v454
        %v456 = vpop.f32.mrb[0].mxu0
        %457 = vdwg.mxu0
        %v458 = vxor.u32 %v440, 2147483648
        %v459 = vxor.u32 %v445, 2147483648
        %v460 = vxor.u32 %v450, 2147483648
        %v461 = vxor.u32 %v455, 2147483648
        %v462 = vmul.f32 %v458, 1.442695
        %v463 = vpow.pop %v462
        %v464 = vmul.f32 %v459, 1.442695
        %v465 = vpow.pop %v464
        %v466 = vmul.f32 %v460, 1.442695
        %v467 = vpow.pop %v466
        %v468 = vmul.f32 %v461, 1.442695
        %v469 = vpow.pop %v468
        %v470 = vadd.f32 %v463, 1.0
        %v471 = vadd.f32 %v465, 1.0
        %v472 = vadd.f32 %v467, 1.0
        %v473 = vadd.f32 %v469, 1.0
        %v474 = vrcp.pop %v470
        %v475 = vmul.f32 1.0, %v474
        %v476 = vrcp.pop %v471
        %v477 = vmul.f32 1.0, %v476
        %v478 = vrcp.pop %v472
        %v479 = vmul.f32 1.0, %v478
        %v480 = vrcp.pop %v473
        %v481 = vmul.f32 1.0, %v480
        %483 = vset.pattern.permute.xlu0 0
        %484 = vperm.xlu0 %483, %v475
        %v485 = vpop.permute.xlu0 %484
        %488 = vset.pattern.permute.xlu0 0
        %489 = vperm.xlu0 %488, %v477
        %v490 = vpop.permute.xlu0 %489
        %493 = vset.pattern.permute.xlu0 0
        %494 = vperm.xlu0 %493, %v479
        %v495 = vpop.permute.xlu0 %494
        %498 = vset.pattern.permute.xlu0 0
        %499 = vperm.xlu0 %498, %v481
        %v500 = vpop.permute.xlu0 %499
        %v502 = vmul.f32 %v243, %v485
        %v503 = vmul.f32 %v244, %v485
        %v504 = vmul.f32 %v245, %v490
        %v505 = vmul.f32 %v246, %v490
        %v506 = vmul.f32 %v247, %v495
        %v507 = vmul.f32 %v248, %v495
        %v508 = vmul.f32 %v249, %v500
        %v509 = vmul.f32 %v250, %v500
        %510 = vst [vmem:[%s242] sm:$0xff] %v502
        %511 = vst [vmem:[%s242 + $0x8] sm:$0xff] %v503
        %512 = vst [vmem:[%s242 + $0x10] sm:$0xff] %v504
        %513 = vst [vmem:[%s242 + $0x18] sm:$0xff] %v505
        %514 = vst [vmem:[%s242 + $0x20] sm:$0xff] %v506
        %515 = vst [vmem:[%s242 + $0x28] sm:$0xff] %v507
        %516 = vst [vmem:[%s242 + $0x30] sm:$0xff] %v508
        %517 = vst [vmem:[%s242 + $0x38] sm:$0xff] %v509
        %s518 = sand.u32 %s140, 1
        %s519 = scalar_lea.sflag [#allocation4], %s518
        %s520 = sand.u32 %s140, 1
        %s521 = smul.addr %s520, 64
        %s522 = scalar_lea.vmem [#allocation5], %s521
        // Predicated region
        $region45: #{tpu_custom_call.1} parent=39 // pred_check
          %p523 = pneg %p150
        $region46: #{tpu_custom_call.1} parent=39 // pred_check_branch
          %525 = sbr.rel (%p523) target = $region48
        $region47: #{tpu_custom_call.1} parent=39 // pred_region
          %s527 = ssub.s32 1024, 1024
          %528 = vsyncadd %s519, %s527
          %s529 = smul.addr %s22, 8
          %s530 = smul.addr %s529, 128
          %s531 = scalar_lea.hbm %s5, %s530
          %s532 = sshll.u32 %s522, 4
          %s533 = int_to_ptr.vmem [resolvable:$true] %s532
          %538 = dma.vmem_to_hbm [thread:$0]  %s533, 1024, %s531, %s519, 256, 256, 16
        $region48: #{tpu_custom_call.1} parent=39 // pred_fallthru
          _
      $region40: #{tpu_custom_call.1} parent=5 // pred_fallthru
        _
      %p539 = scmp.le.s32.totalorder 2, %s17
      // Predicated region
      $region49: #{tpu_custom_call.1} parent=5 // pred_check
        %p540 = pneg %p539
      $region50: #{tpu_custom_call.1} parent=5 // pred_check_branch
        %542 = sbr.rel (%p540) target = $region52
      $region51: #{tpu_custom_call.1} parent=5 // pred_region
        %s543 = ssub.s32 %s17, 2
        // Predicated region
        $region53: #{tpu_custom_call.1} parent=51 // pred_check
          %p544 = pneg %p156
        $region54: #{tpu_custom_call.1} parent=51 // pred_check_branch
          %546 = sbr.rel (%p544) target = $region56
        $region55: #{tpu_custom_call.1} parent=51 // pred_region
          %s547 = sand.u32 %s141, 1
          %s548 = scalar_lea.sflag [#allocation4], %s547
          %s549 = sand.u32 %s141, 1
          %s550 = smul.addr %s549, 64
          %s551 = scalar_lea.vmem [#allocation5], %s550
          %552 = dma.done %s548, 1024
        $region56: #{tpu_custom_call.1} parent=51 // pred_fallthru
          _
      $region52: #{tpu_custom_call.1} parent=5 // pred_fallthru
        _
    $region6: #{tpu_custom_call.1} parent=1 // loop_footer
      %s21 = sadd.s32 1, %s17
    $region7: #{tpu_custom_call.1} parent=1 // loop_footer_branch
      %16 = sbr.rel target = $region3
    $region8: #{tpu_custom_call.1} parent=1 // loop_exit
      _
    %553 = vsyncpa [#allocation3], 1
    %s554 = scalar_lea.sflag [#allocation3], 1
    %555 = vsyncpa %s554, 1
    %556 = vsyncpa [#allocation4], 1
    %s557 = scalar_lea.sflag [#allocation4], 1
    %558 = vsyncpa %s557, 1

</llo_original>
